<compile_context>
chip_gen: v7x
topology: tpu7x:2x2x1
jax: 0.10.0
libtpu: 0.0.40
codegen_flags: <defaults>
</compile_context>

<pallas_src>
import functools
from typing import NamedTuple

import jax
import jax.numpy as jnp
from jax.experimental import pallas as pl
from jax.experimental.pallas import tpu as pltpu


# ----------------------------------------------------------------------------
# Helpers
# ----------------------------------------------------------------------------
def _round_up(x, m):
    return (x + m - 1) // m * m


def _vmem_budget_bytes():
    """Physical VMEM with ~22% headroom for compiler scratch / semaphores."""
    cap = 64 * 1024 * 1024  # conservative default (v7x per-TensorCore VMEM)
    try:
        info = pltpu.get_tpu_info()
        for name in ("vmem_capacity_bytes", "vmem_bytes"):
            c = getattr(info, name, None)
            if c:
                cap = int(c)
                break
    except Exception:
        pass
    return (cap * 25) // 32


def _tile_caps(budget):
    """(tm_cap, tn_cap, tk_cap) per generation-sized VMEM budget."""
    if budget >= 96 * 1024 * 1024:      # v5e / v6e: 128 MiB physical
        return 512, 1024, 1024
    return 256, 512, 512                # v7x: 64 MiB physical


def _pick_lane_tile(dim, cap, max_waste=0.30):
    """Pick (tile, padded_dim): widest lane-dense tile whose padding waste is
    acceptable; fall back to the largest divisor of the 128-aligned size."""
    for t in (1024, 768, 512, 384, 256, 128):
        if t > cap:
            continue
        padded = _round_up(dim, t)
        if (padded - dim) / padded <= max_waste:
            return t, padded
    padded = _round_up(dim, 128)
    for t in (1024, 512, 256, 128):
        if t <= cap and padded % t == 0:
            return t, padded
    return 128, padded


# ----------------------------------------------------------------------------
# One-time parameter prep (layout, cast, pad — NOT on the per-call path)
# ----------------------------------------------------------------------------
class GLUParams(NamedTuple):
    w_fused: jax.Array      # (k_pad, grid_n * 2*tn); column block j = [lin_j | gate_j]
    b_fused: jax.Array      # (1, grid_n * 2*tn), float32, same block layout
    input_dim: int
    output_dim: int
    k_pad: int
    n_pad: int
    tn: int


def prepare_glu_params(weight, bias, *, param_dtype=jnp.bfloat16):
    """weight: (2*output_dim, input_dim) torch nn.Linear layout; bias: (2*output_dim,)."""
    two_n, input_dim = weight.shape
    assert two_n % 2 == 0 and bias.shape == (two_n,)
    output_dim = two_n // 2

    budget = _vmem_budget_bytes()
    _, tn_cap, _ = _tile_caps(budget)

    is_bf16 = jnp.dtype(param_dtype) == jnp.dtype(jnp.bfloat16)
    k_align = 256 if is_bf16 else 128
    k_pad = _round_up(input_dim, k_align)
    tn, n_pad = _pick_lane_tile(output_dim, tn_cap)
    grid_n = n_pad // tn

    w_t = jnp.asarray(weight).T.astype(param_dtype)          # (input_dim, 2*output_dim)
    pad = ((0, k_pad - input_dim), (0, n_pad - output_dim))
    w_lin = jnp.pad(w_t[:, :output_dim], pad)
    w_gat = jnp.pad(w_t[:, output_dim:], pad)
    w_fused = jnp.concatenate(
        [w_lin.reshape(k_pad, grid_n, tn), w_gat.reshape(k_pad, grid_n, tn)],
        axis=-1).reshape(k_pad, grid_n * 2 * tn)

    b = jnp.asarray(bias).astype(jnp.float32)
    b_lin = jnp.pad(b[:output_dim], (0, n_pad - output_dim)).reshape(grid_n, tn)
    b_gat = jnp.pad(b[output_dim:], (0, n_pad - output_dim)).reshape(grid_n, tn)
    b_fused = jnp.concatenate([b_lin, b_gat], axis=-1).reshape(1, grid_n * 2 * tn)

    return GLUParams(w_fused, b_fused, int(input_dim), int(output_dim),
                     int(k_pad), int(n_pad), int(tn))


# ----------------------------------------------------------------------------
# Kernels
# ----------------------------------------------------------------------------
def _glu_kernel(x_ref, w_ref, b_ref, o_ref, *, activation, tn):
    """K un-tiled: one fused (tm,K)x(K,2tn) dot, f32 epilogue."""
    x = x_ref[...]
    w = w_ref[...]
    if x.dtype != w.dtype:
        x = x.astype(w.dtype)                      # per-tile VPU cast (bf16 MXU path)
    y = jnp.dot(x, w, preferred_element_type=jnp.float32)
    y = y + b_ref[...].astype(jnp.float32)
    lin, gat = y[:, :tn], y[:, tn:]
    gate = jax.nn.sigmoid(gat) if activation == "sigmoid" else jnp.tanh(gat)
    o_ref[...] = (lin * gate).astype(o_ref.dtype)


def _glu_kernel_ktiled(x_ref, w_ref, b_ref, o_ref, acc_ref, *, activation, tn):
    """K tiled (innermost grid axis): single fused f32 accumulator."""
    k = pl.program_id(2)

    @pl.when(k == 0)
    def _():
        acc_ref[...] = jnp.zeros_like(acc_ref)

    x = x_ref[...]
    w = w_ref[...]
    if x.dtype != w.dtype:
        x = x.astype(w.dtype)
    acc_ref[...] += jnp.dot(x, w, preferred_element_type=jnp.float32)

    @pl.when(k == pl.num_programs(2) - 1)
    def _():
        y = acc_ref[...] + b_ref[...].astype(jnp.float32)
        lin, gat = y[:, :tn], y[:, tn:]
        gate = jax.nn.sigmoid(gat) if activation == "sigmoid" else jnp.tanh(gat)
        o_ref[...] = (lin * gate).astype(o_ref.dtype)


# ----------------------------------------------------------------------------
# Per-call wrapper (only activation-side shaping on this path)
# ----------------------------------------------------------------------------
def gated_linear_unit(x, params: GLUParams, activation="sigmoid", *,
                      k_tile_threshold=2048, tk_max=None):
    assert activation in ("sigmoid", "tanh")
    input_dim, output_dim = params.input_dim, params.output_dim
    k_pad, n_pad, tn = params.k_pad, params.n_pad, params.tn
    grid_n = n_pad // tn
    assert x.shape[-1] == input_dim

    lead_shape = x.shape[:-1]
    x2 = x.reshape(-1, input_dim)                 # flatten leading dims -> bigger M
    batch = x2.shape[0]
    out_dtype = x.dtype

    budget = _vmem_budget_bytes()
    tm_cap, _, tk_cap = _tile_caps(budget)
    if tk_max is not None:
        tk_cap = min(tk_cap, tk_max)

    w_dtype = jnp.dtype(params.w_fused.dtype)
    is_bf16 = w_dtype == jnp.dtype(jnp.bfloat16)
    m_align = 16 if is_bf16 else 8
    k_align = 256 if is_bf16 else 128

    m_pad = _round_up(batch, m_align)
    if m_pad <= tm_cap:
        tm = m_pad
    else:
        tm = tm_cap
        m_pad = _round_up(batch, tm)
    grid_m = m_pad // tm

    if (m_pad, k_pad) != x2.shape:
        x2 = jnp.pad(x2, ((0, m_pad - batch), (0, k_pad - input_dim)))

    x_isz = jnp.dtype(x2.dtype).itemsize
    w_isz = w_dtype.itemsize
    out_isz = jnp.dtype(out_dtype).itemsize

    def vmem_need(tk, tiled):
        step_in = tm * tk * x_isz + tk * 2 * tn * w_isz + 2 * tn * 4
        step_out = tm * tn * out_isz
        acc = tm * 2 * tn * 4 if tiled else 0
        return 2 * step_in + 2 * step_out + acc   # double-buffered in/out + acc

    tile_k = (k_pad > k_tile_threshold) or (vmem_need(k_pad, False) > budget)
    if tile_k:
        tk = k_align
        for cand in (1024, 512, 256, 128):
            if cand > tk_cap or cand % k_align or k_pad % cand:
                continue
            if vmem_need(cand, True) <= budget:
                tk = cand
                break
    else:
        tk = k_pad
    grid_k = k_pad // tk

    need = vmem_need(tk, tile_k)
    vmem_limit = int(min(budget, max(2 * need, 32 * 1024 * 1024)))

    cost = pl.CostEstimate(
        flops=4 * batch * input_dim * output_dim + 8 * batch * output_dim,
        transcendentals=batch * output_dim,
        bytes_accessed=int(x2.size * x_isz + params.w_fused.size * w_isz
                           + params.b_fused.size * 4 + m_pad * n_pad * out_isz))

    if tile_k:
        kernel = functools.partial(_glu_kernel_ktiled, activation=activation, tn=tn)
        grid = (grid_m, grid_n, grid_k)
        in_specs = [
            pl.BlockSpec((tm, tk), lambda i, j, k: (i, k)),          # x
            pl.BlockSpec((tk, 2 * tn), lambda i, j, k: (k, j)),      # fused [lin|gate] W
            pl.BlockSpec((1, 2 * tn), lambda i, j, k: (0, j)),       # fused bias
        ]
        out_specs = pl.BlockSpec((tm, tn), lambda i, j, k: (i, j))
        scratch_shapes = (pltpu.VMEM((tm, 2 * tn), jnp.float32),)
        dim_sem = ("parallel", "parallel", "arbitrary")
    else:
        kernel = functools.partial(_glu_kernel, activation=activation, tn=tn)
        scratch_shapes = ()
        x_bytes = m_pad * k_pad * x_isz
        w_bytes = k_pad * 2 * n_pad * w_isz
        if w_bytes + grid_n * x_bytes <= x_bytes + grid_m * w_bytes:
            # Weights stay VMEM-resident across the inner batch axis (x streams).
            grid = (grid_n, grid_m)
            in_specs = [
                pl.BlockSpec((tm, k_pad), lambda j, i: (i, 0)),
                pl.BlockSpec((k_pad, 2 * tn), lambda j, i: (0, j)),
                pl.BlockSpec((1, 2 * tn), lambda j, i: (0, j)),
            ]
            out_specs = pl.BlockSpec((tm, tn), lambda j, i: (i, j))
        else:
            # Activations stay VMEM-resident; weights stream across the inner N axis.
            grid = (grid_m, grid_n)
            in_specs = [
                pl.BlockSpec((tm, k_pad), lambda i, j: (i, 0)),
                pl.BlockSpec((k_pad, 2 * tn), lambda i, j: (0, j)),
                pl.BlockSpec((1, 2 * tn), lambda i, j: (0, j)),
            ]
            out_specs = pl.BlockSpec((tm, tn), lambda i, j: (i, j))
        dim_sem = ("parallel", "parallel")

    out_padded = pl.pallas_call(
        kernel,
        out_shape=jax.ShapeDtypeStruct((m_pad, n_pad), out_dtype),
        grid_spec=pltpu.PrefetchScalarGridSpec(
            num_scalar_prefetch=0,
            grid=grid,
            in_specs=in_specs,
            out_specs=out_specs,
            scratch_shapes=scratch_shapes),
        compiler_params=pltpu.CompilerParams(
            dimension_semantics=dim_sem,
            vmem_limit_bytes=vmem_limit),
        cost_estimate=cost,
    )(x2, params.w_fused, params.b_fused)

    out = out_padded[:batch, :output_dim]
    return out.reshape(lead_shape + (output_dim,))


# ----------------------------------------------------------------------------
# Pure-JAX reference (mirrors the PyTorch module) + smoke tests
# ----------------------------------------------------------------------------
def glu_reference(x, weight, bias, output_dim, activation="sigmoid"):
    y = x @ weight.T + bias
    lin, gat = y[..., :output_dim], y[..., output_dim:]
    gate = jax.nn.sigmoid(gat) if activation == "sigmoid" else jnp.tanh(gat)
    return lin * gate


if __name__ == "__main__":
    def make_inputs(seed, input_dim, output_dim, batch_shape):
        kx, kw, kb = jax.random.split(jax.random.PRNGKey(seed), 3)
        x = jax.random.normal(kx, batch_shape + (input_dim,), dtype=jnp.float32)
        bound = 1.0 / (input_dim ** 0.5)
        weight = jax.random.uniform(kw, (2 * output_dim, input_dim),
                                    minval=-bound, maxval=bound, dtype=jnp.float32)
        bias = jax.random.uniform(kb, (2 * output_dim,),
                                  minval=-bound, maxval=bound, dtype=jnp.float32)
        return x, weight, bias

    # Case 1: tiny TabNet-like shape, f32 params (exact check), both activations,
    # K-untiled fused-dot path.
    x, w, b = make_inputs(0, input_dim=32, output_dim=32, batch_shape=(8,))
    p_f32 = prepare_glu_params(w, b, param_dtype=jnp.float32)
    for act in ("sigmoid", "tanh"):
        out = jax.block_until_ready(gated_linear_unit(x, p_f32, act))
        ref = glu_reference(x, w, b, 32, act)
        assert out.shape == (8, 32)
        assert jnp.allclose(out, ref, atol=1e-5, rtol=1e-5), \
            float(jnp.max(jnp.abs(out - ref)))

    # Case 2: default bf16 weights (halved HBM weight streaming), f32 epilogue.
    p_bf16 = prepare_glu_params(w, b)          # bf16 by default
    out2 = jax.block_until_ready(gated_linear_unit(x, p_bf16, "sigmoid"))
    ref2 = glu_reference(x, w, b, 32, "sigmoid")
    assert jnp.allclose(out2, ref2, atol=3e-2, rtol=3e-2), \
        float(jnp.max(jnp.abs(out2 - ref2)))

    # Case 3: K-tiled single-accumulator path (thresholds lowered so grid_k = 2).
    x3, w3, b3 = make_inputs(1, input_dim=256, output_dim=128, batch_shape=(16,))
    p3 = prepare_glu_params(w3, b3, param_dtype=jnp.float32)
    out3 = jax.block_until_ready(
        gated_linear_unit(x3, p3, "sigmoid", k_tile_threshold=128, tk_max=128))
    ref3 = glu_reference(x3, w3, b3, 128, "sigmoid")
    assert jnp.allclose(out3, ref3, atol=1e-4, rtol=1e-4), \
        float(jnp.max(jnp.abs(out3 - ref3)))

    # Case 4: leading dims are flattened into M before the kernel.
    x4 = x3.reshape(2, 8, 256)
    out4 = jax.block_until_ready(gated_linear_unit(x4, p3, "sigmoid"))
    assert out4.shape == (2, 8, 128)
    assert jnp.allclose(out4.reshape(16, 128), ref3, atol=1e-5, rtol=1e-5), \
        float(jnp.max(jnp.abs(out4.reshape(16, 128) - ref3)))

    print("KERNEL_OK")
</pallas_src>

<mosaic_0001>
module attributes {stable_mosaic.version = 11 : i64} {
  func.func @_glu_kernel(%arg0: i32, %arg1: i32, %arg2: memref<8x128xf32, #tpu.memory_space<vmem>>, %arg3: memref<128x256xf32, #tpu.memory_space<vmem>>, %arg4: memref<1x256xf32, #tpu.memory_space<vmem>>, %arg5: memref<8x128xf32, #tpu.memory_space<vmem>>) attributes {dimension_semantics = [#tpu.dimension_semantics<parallel>, #tpu.dimension_semantics<parallel>], iteration_bounds = array<i64: 1, 1>, scalar_prefetch = 0 : i64, scratch_operands = 0 : i64, tpu.core_type = #tpu.core_type<tc>, window_params = [{transform_indices = @transform_0, window_bounds = array<i64: 8, 128>}, {transform_indices = @transform_1, window_bounds = array<i64: 128, 256>}, {transform_indices = @transform_2, window_bounds = array<i64: 1, 256>}, {transform_indices = @transform_3, window_bounds = array<i64: 8, 128>}]} {
    %c0 = arith.constant 0 : index
    %c0_0 = arith.constant 0 : index
    %0 = vector.load %arg2[%c0, %c0_0] : memref<8x128xf32, #tpu.memory_space<vmem>>, vector<8x128xf32>
    %c0_1 = arith.constant 0 : index
    %c0_2 = arith.constant 0 : index
    %1 = vector.load %arg3[%c0_1, %c0_2] : memref<128x256xf32, #tpu.memory_space<vmem>>, vector<128x256xf32>
    %cst = arith.constant dense<0.000000e+00> : vector<8x256xf32>
    %2 = tpu.matmul %0, %1, %cst {dimension_numbers = #tpu.dot_dimension_numbers<[1], [0], [0], [1], [0, 0, 1, 1], [], []>} : vector<8x128xf32>, vector<128x256xf32>, vector<8x256xf32> -> vector<8x256xf32>
    %c0_3 = arith.constant 0 : index
    %c0_4 = arith.constant 0 : index
    %3 = vector.load %arg4[%c0_3, %c0_4] : memref<1x256xf32, #tpu.memory_space<vmem>>, vector<1x256xf32>
    %4 = vector.broadcast %3 : vector<1x256xf32> to vector<8x256xf32>
    %5 = arith.addf %2, %4 : vector<8x256xf32>
    %6 = vector.extract_strided_slice %5 {offsets = [0, 0], sizes = [8, 128], strides = [1, 1]} : vector<8x256xf32> to vector<8x128xf32>
    %7 = vector.extract_strided_slice %5 {offsets = [0, 128], sizes = [8, 128], strides = [1, 1]} : vector<8x256xf32> to vector<8x128xf32>
    %8 = arith.negf %7 : vector<8x128xf32>
    %9 = math.exp %8 : vector<8x128xf32>
    %cst_5 = arith.constant 1.000000e+00 : f32
    %10 = vector.broadcast %cst_5 : f32 to vector<8x128xf32>
    %11 = arith.addf %10, %9 : vector<8x128xf32>
    %12 = arith.divf %10, %11 : vector<8x128xf32>
    %13 = arith.mulf %6, %12 : vector<8x128xf32>
    %c0_6 = arith.constant 0 : index
    %c0_7 = arith.constant 0 : index
    %14 = vector.load %arg5[%c0_6, %c0_7] : memref<8x128xf32, #tpu.memory_space<vmem>>, vector<8x128xf32>
    tpu.vector_store %arg5[%c0_6, %c0_7], %13 {strides = array<i32>} : memref<8x128xf32, #tpu.memory_space<vmem>>, vector<8x128xf32>,
    return
  }
  func.func @transform_0(%arg0: i32, %arg1: i32) -> (i32, i32) {
    %c0_i32 = arith.constant 0 : i32
    %c0_i32_0 = arith.constant 0 : i32
    return %arg1, %c0_i32 : i32, i32
  }
  func.func @transform_1(%arg0: i32, %arg1: i32) -> (i32, i32) {
    %c0_i32 = arith.constant 0 : i32
    %c0_i32_0 = arith.constant 0 : i32
    return %c0_i32, %arg0 : i32, i32
  }
  func.func @transform_2(%arg0: i32, %arg1: i32) -> (i32, i32) {
    %c0_i32 = arith.constant 0 : i32
    %c0_i32_0 = arith.constant 0 : i32
    return %c0_i32, %arg0 : i32, i32
  }
  func.func @transform_3(%arg0: i32, %arg1: i32) -> (i32, i32) {
    %c0_i32 = arith.constant 0 : i32
    return %arg1, %arg0 : i32, i32
  }
}

</mosaic_0001>

<llo_original>
// kernel: tpu_custom_call.1
$region0: #{tpu_custom_call.1}
  #allocation0 [shape = 'u32[]', space=smem, size = 0x4, offset = 0x4, fixed_abs, tag = 'smem constant byte address 0x4 - core index']
  #allocation1 [shape = 'u32[144,128]{1,0:T(1,128)}', space=vmem, size = 0x12000, scoped, tag = 'internal scratch']
  %s0 = inlined_call_operand.hbm [shape: f32[8,128], index: 0, kind: input, shape index: {}]
  %s1 = inlined_call_operand.hbm [shape: f32[128,256], index: 1, kind: input, shape index: {}]
  %s2 = inlined_call_operand.vmem [shape: f32[1,256], index: 2, kind: input, shape index: {}]
  %s3 = inlined_call_operand.hbm [shape: f32[8,128], index: 3, kind: output, shape index: {}]
  %s4 = sld [smem:[#allocation0]]
  $region30: #{tpu_custom_call.1} parent=0
    _
  %s6 = ssub.s32 1, %s4
  %s7 = scalar_select 0, %s6, %s4
  $region1: #{tpu_custom_call.1} parent=0
    #allocation2 [shape = 'u8[4096]{0}', space=vmem, size = 0x1000, scoped, tag = 'input window, operand 0, single buffered']
    #allocation3 [shape = 's32[1]{0}', space=sflag, size = 0x4, scoped, tag = 'scoped memory for tpu_custom_call.1']
    #allocation4 [shape = 's32[1]{0}', space=sflag, size = 0x4, scoped, tag = 'scoped memory for tpu_custom_call.1']
    #allocation5 [shape = 'u8[131072]{0}', space=vmem, size = 0x20000, scoped, tag = 'input window, operand 1, single buffered']
    #allocation6 [shape = 's32[1]{0}', space=sflag, size = 0x4, scoped, tag = 'scoped memory for tpu_custom_call.1']
    #allocation7 [shape = 'u8[4096]{0}', space=vmem, size = 0x1000, scoped, tag = 'output window, operand 0, single buffered']
    %8 = vsyncpa [#allocation3], 0
    %9 = vsyncpa [#allocation6], 0
    %10 = vsyncpa [#allocation4], 0
    // Predicated region
    $region2: #{tpu_custom_call.1} parent=1 // pred_check
      _
    $region3: #{tpu_custom_call.1} parent=1 // pred_check_branch
      %12 = sbr.rel (0) target = $region5
    $region4: #{tpu_custom_call.1} parent=1 // pred_region
      %s14 = ssub.s32 128, 128
      %15 = vsyncadd [#allocation3], %s14
      %s17 = sshll.u32 [#allocation2], 4
      %s18 = int_to_ptr.vmem [resolvable:$true] %s17
      %20 = dma.hbm_to_vmem [thread:$0]  %s0, 128, %s18, [#allocation3]
    $region5: #{tpu_custom_call.1} parent=1 // pred_fallthru
      _
    // Predicated region
    $region6: #{tpu_custom_call.1} parent=1 // pred_check
      _
    $region7: #{tpu_custom_call.1} parent=1 // pred_check_branch
      %22 = sbr.rel (0) target = $region9
    $region8: #{tpu_custom_call.1} parent=1 // pred_region
      %s24 = ssub.s32 4096, 4096
      %25 = vsyncadd [#allocation6], %s24
      %s26 = sshll.u32 [#allocation5], 4
      %s27 = int_to_ptr.vmem [resolvable:$true] %s26
      %32 = dma.hbm_to_vmem [thread:$0]  %s1, 4096, %s27, [#allocation6], 256, 256, 16
    $region9: #{tpu_custom_call.1} parent=1 // pred_fallthru
      _
    // Predicated region
    $region10: #{tpu_custom_call.1} parent=1 // pred_check
      _
    $region11: #{tpu_custom_call.1} parent=1 // pred_check_branch
      %34 = sbr.rel (0) target = $region13
    $region12: #{tpu_custom_call.1} parent=1 // pred_region
      _
    $region13: #{tpu_custom_call.1} parent=1 // pred_fallthru
      _
    // Predicated region
    $region14: #{tpu_custom_call.1} parent=1 // pred_check
      _
    $region15: #{tpu_custom_call.1} parent=1 // pred_check_branch
      %36 = sbr.rel (0) target = $region17
    $region16: #{tpu_custom_call.1} parent=1 // pred_region
      %37 = dma.done [#allocation3], 128
    $region17: #{tpu_custom_call.1} parent=1 // pred_fallthru
      _
    // Predicated region
    $region18: #{tpu_custom_call.1} parent=1 // pred_check
      _
    $region19: #{tpu_custom_call.1} parent=1 // pred_check_branch
      %39 = sbr.rel (0) target = $region21
    $region20: #{tpu_custom_call.1} parent=1 // pred_region
      %40 = dma.done [#allocation6], 4096
    $region21: #{tpu_custom_call.1} parent=1 // pred_fallthru
      _
    %v41 = vld [vmem:[#allocation2] sm:$0xff]
    %v42 = vld [vmem:[#allocation5] sm:$0xff]
    %v43 = vld [vmem:[#allocation5 + $0x8] sm:$0xff]
    %v44 = vld [vmem:[#allocation5 + $0x10] sm:$0xff]
    %v45 = vld [vmem:[#allocation5 + $0x18] sm:$0xff]
    %v46 = vld [vmem:[#allocation5 + $0x20] sm:$0xff]
    %v47 = vld [vmem:[#allocation5 + $0x28] sm:$0xff]
    %v48 = vld [vmem:[#allocation5 + $0x30] sm:$0xff]
    %v49 = vld [vmem:[#allocation5 + $0x38] sm:$0xff]
    %v50 = vld [vmem:[#allocation5 + $0x40] sm:$0xff]
    %v51 = vld [vmem:[#allocation5 + $0x48] sm:$0xff]
    %v52 = vld [vmem:[#allocation5 + $0x50] sm:$0xff]
    %v53 = vld [vmem:[#allocation5 + $0x58] sm:$0xff]
    %v54 = vld [vmem:[#allocation5 + $0x60] sm:$0xff]
    %v55 = vld [vmem:[#allocation5 + $0x68] sm:$0xff]
    %v56 = vld [vmem:[#allocation5 + $0x70] sm:$0xff]
    %v57 = vld [vmem:[#allocation5 + $0x78] sm:$0xff]
    %v58 = vld [vmem:[#allocation5 + $0x80] sm:$0xff]
    %v59 = vld [vmem:[#allocation5 + $0x88] sm:$0xff]
    %v60 = vld [vmem:[#allocation5 + $0x90] sm:$0xff]
    %v61 = vld [vmem:[#allocation5 + $0x98] sm:$0xff]
    %v62 = vld [vmem:[#allocation5 + $0xa0] sm:$0xff]
    %v63 = vld [vmem:[#allocation5 + $0xa8] sm:$0xff]
    %v64 = vld [vmem:[#allocation5 + $0xb0] sm:$0xff]
    %v65 = vld [vmem:[#allocation5 + $0xb8] sm:$0xff]
    %v66 = vld [vmem:[#allocation5 + $0xc0] sm:$0xff]
    %v67 = vld [vmem:[#allocation5 + $0xc8] sm:$0xff]
    %v68 = vld [vmem:[#allocation5 + $0xd0] sm:$0xff]
    %v69 = vld [vmem:[#allocation5 + $0xd8] sm:$0xff]
    %v70 = vld [vmem:[#allocation5 + $0xe0] sm:$0xff]
    %v71 = vld [vmem:[#allocation5 + $0xe8] sm:$0xff]
    %v72 = vld [vmem:[#allocation5 + $0xf0] sm:$0xff]
    %v73 = vld [vmem:[#allocation5 + $0xf8] sm:$0xff]
    %v74 = vld [vmem:[%s2] sm:$0x3]
    %v76 = vlaneseq
    %v77 = vshrl.u32 %v76, 7
    %v78 = vsub.s32 0, %v77
    %v79 = vrot.slane %v74, %v78
    %v80 = vlaneseq
    %v81 = vshrl.u32 %v80, 7
    %v82 = vsub.s32 1, %v81
    %v83 = vrot.slane %v74, %v82
    %86 = vmatprep.subr.mxu0 %v43
    %87 = vmatpush1.msra.mxu0 %v42
    %88 = vmatprep.subr.mxu0 %v45
    %89 = vmatpush1.msra.mxu0 %v44
    %90 = vmatprep.subr.mxu0 %v47
    %91 = vmatpush1.msra.mxu0 %v46
    %92 = vmatprep.subr.mxu0 %v49
    %93 = vmatpush1.msra.mxu0 %v48
    %94 = vmatprep.subr.mxu0 %v51
    %95 = vmatpush1.msra.mxu0 %v50
    %96 = vmatprep.subr.mxu0 %v53
    %97 = vmatpush1.msra.mxu0 %v52
    %98 = vmatprep.subr.mxu0 %v55
    %99 = vmatpush1.msra.mxu0 %v54
    %100 = vmatprep.subr.mxu0 %v57
    %101 = vmatpush1.msra.mxu0 %v56
    %102 = vmatprep.subr.mxu0 %v59
    %103 = vmatpush1.msra.mxu0 %v58
    %104 = vmatprep.subr.mxu0 %v61
    %105 = vmatpush1.msra.mxu0 %v60
    %106 = vmatprep.subr.mxu0 %v63
    %107 = vmatpush1.msra.mxu0 %v62
    %108 = vmatprep.subr.mxu0 %v65
    %109 = vmatpush1.msra.mxu0 %v64
    %110 = vmatprep.subr.mxu0 %v67
    %111 = vmatpush1.msra.mxu0 %v66
    %112 = vmatprep.subr.mxu0 %v69
    %113 = vmatpush1.msra.mxu0 %v68
    %114 = vmatprep.subr.mxu0 %v71
    %115 = vmatpush1.msra.mxu0 %v70
    %116 = vmatprep.subr.mxu0 %v73
    %117 = vmatpush1.msra.mxu0 %v72
    %118 = vmatprep.subr.mxu0 0.0
    %119 = vmatpush1.msra.mxu0 0.0
    %120 = vmatprep.subr.mxu0 0.0
    %121 = vmatpush1.msra.mxu0 0.0
    %122 = vmatprep.subr.mxu0 0.0
    %123 = vmatpush1.msra.mxu0 0.0
    %124 = vmatprep.subr.mxu0 0.0
    %125 = vmatpush1.msra.mxu0 0.0
    %126 = vmatprep.subr.mxu0 0.0
    %127 = vmatpush1.msra.mxu0 0.0
    %128 = vmatprep.subr.mxu0 0.0
    %129 = vmatpush1.msra.mxu0 0.0
    %130 = vmatprep.subr.mxu0 0.0
    %131 = vmatpush1.msra.mxu0 0.0
    %132 = vmatprep.subr.mxu0 0.0
    %133 = vmatpush1.msra.mxu0 0.0
    %134 = vmatprep.subr.mxu0 0.0
    %135 = vmatpush1.msra.mxu0 0.0
    %136 = vmatprep.subr.mxu0 0.0
    %137 = vmatpush1.msra.mxu0 0.0
    %138 = vmatprep.subr.mxu0 0.0
    %139 = vmatpush1.msra.mxu0 0.0
    %140 = vmatprep.subr.mxu0 0.0
    %141 = vmatpush1.msra.mxu0 0.0
    %142 = vmatprep.subr.mxu0 0.0
    %143 = vmatpush1.msra.mxu0 0.0
    %144 = vmatprep.subr.mxu0 0.0
    %145 = vmatpush1.msra.mxu0 0.0
    %146 = vmatprep.subr.mxu0 0.0
    %147 = vmatpush1.msra.mxu0 0.0
    %148 = vmatprep.subr.mxu0 0.0
    %149 = vmatpush1.msra.mxu0 0.0
    %150 = vmatprep.mubr.f32.mxu0 0.0
    %151 = vmatmul.mubr.f32.gmra.mrb[0].mxu0 %v41
    %v152 = vpop.f32.mrb[0].mxu0
    %v153 = vadd.f32 %v79, %v152
    %v154 = vpop.f32.mrb[0].mxu0
    %v155 = vadd.f32 %v83, %v154
    %156 = vdwg.mxu0
    %v157 = vxor.u32 %v155, 2147483648
    %v158 = vmul.f32 %v157, 1.442695
    %v159 = vpow.pop %v158
    %v160 = vadd.f32 %v159, 1.0
    %v161 = vrcp.pop %v160
    %v162 = vmul.f32 1.0, %v161
    %v163 = vmul.f32 %v153, %v162
    %164 = vst [vmem:[#allocation7] sm:$0xff] %v163
    // Predicated region
    $region22: #{tpu_custom_call.1} parent=1 // pred_check
      _
    $region23: #{tpu_custom_call.1} parent=1 // pred_check_branch
      %166 = sbr.rel (0) target = $region25
    $region24: #{tpu_custom_call.1} parent=1 // pred_region
      %s168 = ssub.s32 128, 128
      %169 = vsyncadd [#allocation4], %s168
      %s171 = sshll.u32 [#allocation7], 4
      %s172 = int_to_ptr.vmem [resolvable:$true] %s171
      %174 = dma.vmem_to_hbm [thread:$0]  %s172, 128, %s3, [#allocation4]
    $region25: #{tpu_custom_call.1} parent=1 // pred_fallthru
      _
    // Predicated region
    $region26: #{tpu_custom_call.1} parent=1 // pred_check
      _
    $region27: #{tpu_custom_call.1} parent=1 // pred_check_branch
      %176 = sbr.rel (0) target = $region29
    $region28: #{tpu_custom_call.1} parent=1 // pred_region
      %177 = dma.done [#allocation4], 128
    $region29: #{tpu_custom_call.1} parent=1 // pred_fallthru
      _
    %178 = vsyncpa [#allocation3], 1
    %179 = vsyncpa [#allocation6], 1
    %180 = vsyncpa [#allocation4], 1

</llo_original>
